<compile_context>
chip_gen: v7x
topology: tpu7x:2x2x1
jax: 0.10.0
libtpu: 0.0.40
codegen_flags: <defaults>
</compile_context>

<pallas_src>
import numpy as np
import jax
import jax.numpy as jnp
from jax.experimental import pallas as pl
from jax.experimental.pallas import tpu as pltpu


def _round_up(v, m):
    return (v + m - 1) // m * m


def _cdiv(a, b):
    return -(-a // b)


def _sublane(itemsize):
    # rows per packed sublane group: 8 for f32, 16 for bf16, 32 for int8/fp8
    return max(8, 32 // max(1, itemsize))


def _vmem_budget():
    try:
        cap = pltpu.get_tpu_info().vmem_capacity_bytes
    except Exception:
        cap = 64 << 20  # conservative default (v7x per-TC VMEM)
    # leave ~25% headroom for compiler-internal scratch; never ask for > ~96 MiB
    return int(min(cap * 3 // 4, 100 << 20))


def film_presin_kernel(x_ref, gain_ref, bias_ref, w_ref, b_ref, o_ref):
    # x_ref:    (tile_n, in_dim)    native dtype
    # gain_ref: (1, tile_out)       f32   (precomputed style @ Wg^T + bg)
    # bias_ref: (1, tile_out)       f32   (precomputed style @ Wb^T + bb)
    # w_ref:    (in_dim, tile_out)  native dtype, pre-transposed + lane-padded
    # b_ref:    (1, tile_out)       f32
    # o_ref:    (tile_n, tile_out)
    y = jnp.dot(x_ref[...], w_ref[...], preferred_element_type=jnp.float32)
    y = jnp.sin(y + b_ref[...])
    o_ref[...] = (gain_ref[...] * y + bias_ref[...]).astype(o_ref.dtype)


def prepare_params(params, *, compute_dtype=None):
    """One-time parameter preprocessing (hoisted out of the per-call path):
    transpose W, lane-pad W/b to a multiple of 128 columns, optionally cast W
    to bf16 (recommended on v6e/v7x when matching bf16 activations)."""
    out_dim, in_dim = params["w"].shape
    out_pad = _round_up(out_dim, 128)
    pad_c = out_pad - out_dim
    w_t = params["w"].T  # (in_dim, out_dim)
    if compute_dtype is not None:
        w_t = w_t.astype(compute_dtype)
    b_vec = params["b"].astype(jnp.float32).reshape(1, out_dim)
    if pad_c:
        w_t = jnp.pad(w_t, ((0, 0), (0, pad_c)))
        b_vec = jnp.pad(b_vec, ((0, 0), (0, pad_c)))
    return {
        "w_t": w_t, "b_vec": b_vec,
        "wg": params["wg"], "bg": params["bg"],
        "wb": params["wb"], "bb": params["bb"],
        "in_dim": in_dim, "out_dim": out_dim, "out_pad": out_pad,
    }


def film_layer_presin(x, style, prep, *, max_tile_n=2048):
    """x: (b, n, in_dim) or (b, in_dim); style: (b, style_dim).
    `prep` comes from prepare_params. Returns (b, n, out_dim) (or (b, out_dim))."""
    squeeze_n = x.ndim == 2
    if squeeze_n:
        x = x[:, None, :]
    b, n, in_dim = x.shape
    assert in_dim == prep["in_dim"]
    out_dim, out_pad = prep["out_dim"], prep["out_pad"]
    w_t, b_vec = prep["w_t"], prep["b_vec"]
    f32 = jnp.float32
    hi = jax.lax.Precision.HIGHEST

    # --- per-call style modulation: tiny (b, style_dim) matmuls in XLA -----
    s32 = style.astype(f32)
    gain = jnp.dot(s32, prep["wg"].astype(f32).T, precision=hi) + prep["bg"].astype(f32)
    bias = jnp.dot(s32, prep["wb"].astype(f32).T, precision=hi) + prep["bb"].astype(f32)
    pad_c = out_pad - out_dim
    if pad_c:
        gain = jnp.pad(gain, ((0, 0), (0, pad_c)))
        bias = jnp.pad(bias, ((0, 0), (0, pad_c)))
    gain = gain.reshape(b, 1, out_pad)
    bias = bias.reshape(b, 1, out_pad)

    # --- tiling derived from the actual VMEM budget -------------------------
    budget = _vmem_budget()
    x_item = x.dtype.itemsize
    o_item = x.dtype.itemsize
    w_item = w_t.dtype.itemsize
    sub_x = _sublane(x_item)
    sub_w = _sublane(w_item)
    in_dim_l = _round_up(in_dim, 128)    # lane-padded x row in VMEM
    in_dim_s = _round_up(in_dim, sub_w)  # sublane-padded W rows in VMEM

    # out-axis tiling: keep the resident W block under ~budget/4 (<=16 MiB)
    w_budget = min(budget // 4, 16 << 20)
    units = out_pad // 128
    tile_units = units
    if in_dim_s * out_pad * w_item > w_budget:
        tile_units = 1
        for t in range(units, 0, -1):
            if units % t == 0 and in_dim_s * t * 128 * w_item <= w_budget:
                tile_units = t
                break
    tile_out = tile_units * 128
    n_out_tiles = out_pad // tile_out

    # sequence tiling: largest tile_n whose double-buffered x/out blocks fit
    gb_blk = 8 * tile_out * 4                       # (1, tile_out) f32, sublane-padded
    w_blk = in_dim_s * tile_out * w_item
    fixed = w_blk + gb_blk + 2 * 2 * gb_blk         # W + b (resident) + gain/bias (2-buf)
    per_row = in_dim_l * x_item + tile_out * o_item
    avail = budget - fixed - (2 << 20)
    tile_cap = sub_x
    if avail > 0:
        tile_cap = max(sub_x, (avail // (2 * per_row)) // sub_x * sub_x)
    tile_cap = min(tile_cap, max_tile_n)

    n_pad_min = _round_up(n, sub_x)
    n_tiles = _cdiv(n_pad_min, tile_cap)
    if b == 1 and n_out_tiles == 1 and n_tiles == 1 and n_pad_min >= 2 * sub_x:
        n_tiles = 2                                  # keep both v7x TensorCores busy
    tile_n = _round_up(_cdiv(n_pad_min, n_tiles), sub_x)
    n_pad = tile_n * n_tiles                         # minimal padding (no double round-up)
    if n_pad != n:
        x = jnp.pad(x, ((0, 0), (0, n_pad - n), (0, 0)))

    # --- VMEM limit from actual block footprints + headroom -----------------
    x_blk = tile_n * in_dim_l * x_item
    o_blk = tile_n * tile_out * o_item
    vmem_need = 2 * (x_blk + o_blk + 2 * gb_blk) + w_blk + gb_blk
    vmem_limit = int(min(max(vmem_need + (4 << 20), 16 << 20), budget))

    grid = (b, n_out_tiles, n_tiles)                 # W resident across inner n loop

    def _specs(single_buffer_resident):
        kw = {}
        if single_buffer_resident:
            kw = dict(pipeline_mode=pl.Buffered(1))  # grid-invariant W / b: 1 buffer
        in_specs = [
            pl.BlockSpec((None, tile_n, in_dim), lambda i, k, j: (i, j, 0)),   # x
            pl.BlockSpec((None, 1, tile_out), lambda i, k, j: (i, 0, k)),      # gain
            pl.BlockSpec((None, 1, tile_out), lambda i, k, j: (i, 0, k)),      # bias
            pl.BlockSpec((in_dim, tile_out), lambda i, k, j: (0, k), **kw),    # W^T
            pl.BlockSpec((1, tile_out), lambda i, k, j: (0, k), **kw),         # b
        ]
        out_specs = pl.BlockSpec((None, tile_n, tile_out), lambda i, k, j: (i, j, k))
        return in_specs, out_specs

    out_full, err = None, None
    for single_buf in (True, False):                 # fall back if Buffered(1) unsupported
        try:
            in_specs, out_specs = _specs(single_buf)
            out_full = pl.pallas_call(
                film_presin_kernel,
                out_shape=jax.ShapeDtypeStruct((b, n_pad, out_pad), x.dtype),
                grid_spec=pltpu.PrefetchScalarGridSpec(
                    num_scalar_prefetch=0,
                    grid=grid,
                    in_specs=in_specs,
                    out_specs=out_specs,
                ),
                compiler_params=pltpu.CompilerParams(
                    dimension_semantics=("parallel", "parallel", "parallel"),
                    vmem_limit_bytes=vmem_limit,
                ),
            )(x, gain, bias, w_t, b_vec)
            break
        except Exception as e:
            err = e
            out_full = None
    if out_full is None:
        raise err

    out = out_full[:, :n, :out_dim]
    if squeeze_n:
        out = out[:, 0, :]
    return out


def init_params(key, in_dim, out_dim, style_dim):
    """Deterministic init mirroring the PyTorch module's __init__."""
    ks = jax.random.split(key, 6)
    lim_w = np.sqrt(9.0 / in_dim)
    lim_b = 1.0 / np.sqrt(in_dim)
    w = jax.random.uniform(ks[0], (out_dim, in_dim), jnp.float32, -lim_w, lim_w)
    b = jax.random.uniform(ks[1], (out_dim,), jnp.float32, -lim_b, lim_b)
    lim_s = 1.0 / np.sqrt(style_dim)
    wg = jax.random.uniform(ks[2], (out_dim, style_dim), jnp.float32, -lim_s, lim_s) * 0.25
    bg = jnp.ones((out_dim,), jnp.float32)                       # gain_fc.bias filled with 1
    wb = jax.random.uniform(ks[3], (out_dim, style_dim), jnp.float32, -lim_s, lim_s) * 0.25
    bb = jax.random.uniform(ks[4], (out_dim,), jnp.float32, -lim_s, lim_s)
    return {"w": w, "b": b, "wg": wg, "bg": bg, "wb": wb, "bb": bb}


def reference_np(x, style, p):
    """float64 numpy reference of the PyTorch forward."""
    x64 = np.asarray(x, np.float64)
    s64 = np.asarray(style, np.float64)
    gain = s64 @ np.asarray(p["wg"], np.float64).T + np.asarray(p["bg"], np.float64)
    bias = s64 @ np.asarray(p["wb"], np.float64).T + np.asarray(p["bb"], np.float64)
    y = np.sin(x64 @ np.asarray(p["w"], np.float64).T + np.asarray(p["b"], np.float64))
    return gain[:, None, :] * y + bias[:, None, :]


if __name__ == "__main__":
    key = jax.random.PRNGKey(0)
    k_x, k_s, k_p = jax.random.split(key, 3)

    b, n, in_dim, out_dim, style_dim = 2, 8, 32, 32, 16
    x = jax.random.normal(k_x, (b, n, in_dim), jnp.float32)
    style = jax.random.normal(k_s, (b, style_dim), jnp.float32)
    params = init_params(k_p, in_dim, out_dim, style_dim)

    prep = prepare_params(params)            # one-time: transpose + lane-pad W and b
    out = film_layer_presin(x, style, prep)
    out = jax.block_until_ready(out)

    ref = reference_np(x, style, params)
    assert out.shape == (b, n, out_dim)
    np.testing.assert_allclose(np.asarray(out), ref, rtol=1e-4, atol=1e-4)
    print("KERNEL_OK")
</pallas_src>

<mosaic_0001>
module attributes {stable_mosaic.version = 11 : i64} {
  func.func @film_presin_kernel(%arg0: i32, %arg1: i32, %arg2: i32, %arg3: memref<1x8x32xf32, #tpu.memory_space<vmem>>, %arg4: memref<1x1x128xf32, #tpu.memory_space<vmem>>, %arg5: memref<1x1x128xf32, #tpu.memory_space<vmem>>, %arg6: memref<32x128xf32, #tpu.memory_space<vmem>>, %arg7: memref<1x128xf32, #tpu.memory_space<vmem>>, %arg8: memref<1x8x128xf32, #tpu.memory_space<vmem>>) attributes {dimension_semantics = [#tpu.dimension_semantics<parallel>, #tpu.dimension_semantics<parallel>, #tpu.dimension_semantics<parallel>], iteration_bounds = array<i64: 2, 1, 1>, scalar_prefetch = 0 : i64, scratch_operands = 0 : i64, tpu.core_type = #tpu.core_type<tc>, window_params = [{transform_indices = @transform_0, window_bounds = array<i64: 1, 8, 32>}, {transform_indices = @transform_1, window_bounds = array<i64: 1, 1, 128>}, {transform_indices = @transform_2, window_bounds = array<i64: 1, 1, 128>}, {pipeline_mode = #tpu.pipeline_mode<synchronous>, transform_indices = @transform_3, window_bounds = array<i64: 32, 128>}, {pipeline_mode = #tpu.pipeline_mode<synchronous>, transform_indices = @transform_4, window_bounds = array<i64: 1, 128>}, {transform_indices = @transform_5, window_bounds = array<i64: 1, 8, 128>}]} {
    %c0 = arith.constant 0 : index
    %c0_0 = arith.constant 0 : index
    %c0_1 = arith.constant 0 : index
    %0 = vector.load %arg3[%c0, %c0_0, %c0_1] : memref<1x8x32xf32, #tpu.memory_space<vmem>>, vector<1x8x32xf32>
    %1 = vector.shape_cast %0 : vector<1x8x32xf32> to vector<8x32xf32>
    %c0_2 = arith.constant 0 : index
    %c0_3 = arith.constant 0 : index
    %2 = vector.load %arg6[%c0_2, %c0_3] : memref<32x128xf32, #tpu.memory_space<vmem>>, vector<32x128xf32>
    %cst = arith.constant dense<0.000000e+00> : vector<8x128xf32>
    %3 = tpu.matmul %1, %2, %cst {dimension_numbers = #tpu.dot_dimension_numbers<[1], [0], [0], [1], [0, 0, 1, 1], [], []>} : vector<8x32xf32>, vector<32x128xf32>, vector<8x128xf32> -> vector<8x128xf32>
    %c0_4 = arith.constant 0 : index
    %c0_5 = arith.constant 0 : index
    %4 = vector.load %arg7[%c0_4, %c0_5] : memref<1x128xf32, #tpu.memory_space<vmem>>, vector<1x128xf32>
    %5 = vector.broadcast %4 : vector<1x128xf32> to vector<8x128xf32>
    %6 = arith.addf %3, %5 : vector<8x128xf32>
    %7 = math.sin %6 : vector<8x128xf32>
    %c0_6 = arith.constant 0 : index
    %c0_7 = arith.constant 0 : index
    %c0_8 = arith.constant 0 : index
    %8 = vector.load %arg4[%c0_6, %c0_7, %c0_8] : memref<1x1x128xf32, #tpu.memory_space<vmem>>, vector<1x1x128xf32>
    %9 = vector.shape_cast %8 : vector<1x1x128xf32> to vector<1x128xf32>
    %10 = vector.broadcast %9 : vector<1x128xf32> to vector<8x128xf32>
    %11 = arith.mulf %10, %7 : vector<8x128xf32>
    %c0_9 = arith.constant 0 : index
    %c0_10 = arith.constant 0 : index
    %c0_11 = arith.constant 0 : index
    %12 = vector.load %arg5[%c0_9, %c0_10, %c0_11] : memref<1x1x128xf32, #tpu.memory_space<vmem>>, vector<1x1x128xf32>
    %13 = vector.shape_cast %12 : vector<1x1x128xf32> to vector<1x128xf32>
    %14 = vector.broadcast %13 : vector<1x128xf32> to vector<8x128xf32>
    %15 = arith.addf %11, %14 : vector<8x128xf32>
    %c0_12 = arith.constant 0 : index
    %c0_13 = arith.constant 0 : index
    %c0_14 = arith.constant 0 : index
    %16 = vector.load %arg8[%c0_12, %c0_13, %c0_14] : memref<1x8x128xf32, #tpu.memory_space<vmem>>, vector<1x8x128xf32>
    %17 = vector.shape_cast %16 : vector<1x8x128xf32> to vector<8x128xf32>
    %18 = vector.shape_cast %15 : vector<8x128xf32> to vector<1x8x128xf32>
    tpu.vector_store %arg8[%c0_12, %c0_13, %c0_14], %18 {strides = array<i32>} : memref<1x8x128xf32, #tpu.memory_space<vmem>>, vector<1x8x128xf32>,
    return
  }
  func.func @transform_0(%arg0: i32, %arg1: i32, %arg2: i32) -> (i32, i32, i32) {
    %c0_i32 = arith.constant 0 : i32
    %c0_i32_0 = arith.constant 0 : i32
    return %arg0, %arg2, %c0_i32 : i32, i32, i32
  }
  func.func @transform_1(%arg0: i32, %arg1: i32, %arg2: i32) -> (i32, i32, i32) {
    %c0_i32 = arith.constant 0 : i32
    %c0_i32_0 = arith.constant 0 : i32
    return %arg0, %c0_i32, %arg1 : i32, i32, i32
  }
  func.func @transform_2(%arg0: i32, %arg1: i32, %arg2: i32) -> (i32, i32, i32) {
    %c0_i32 = arith.constant 0 : i32
    %c0_i32_0 = arith.constant 0 : i32
    return %arg0, %c0_i32, %arg1 : i32, i32, i32
  }
  func.func @transform_3(%arg0: i32, %arg1: i32, %arg2: i32) -> (i32, i32) {
    %c0_i32 = arith.constant 0 : i32
    %c0_i32_0 = arith.constant 0 : i32
    return %c0_i32, %arg1 : i32, i32
  }
  func.func @transform_4(%arg0: i32, %arg1: i32, %arg2: i32) -> (i32, i32) {
    %c0_i32 = arith.constant 0 : i32
    %c0_i32_0 = arith.constant 0 : i32
    return %c0_i32, %arg1 : i32, i32
  }
  func.func @transform_5(%arg0: i32, %arg1: i32, %arg2: i32) -> (i32, i32, i32) {
    %c0_i32 = arith.constant 0 : i32
    return %arg0, %arg2, %arg1 : i32, i32, i32
  }
}

module attributes {stable_mosaic.version = 11 : i64} {
  func.func @film_presin_kernel(%arg0: i32, %arg1: i32, %arg2: i32, %arg3: memref<1x8x32xf32, #tpu.memory_space<vmem>>, %arg4: memref<1x1x128xf32, #tpu.memory_space<vmem>>, %arg5: memref<1x1x128xf32, #tpu.memory_space<vmem>>, %arg6: memref<32x128xf32, #tpu.memory_space<vmem>>, %arg7: memref<1x128xf32, #tpu.memory_space<vmem>>, %arg8: memref<1x8x128xf32, #tpu.memory_space<vmem>>) attributes {dimension_semantics = [#tpu.dimension_semantics<parallel>, #tpu.dimension_semantics<parallel>, #tpu.dimension_semantics<parallel>], iteration_bounds = array<i64: 2, 1, 1>, scalar_prefetch = 0 : i64, scratch_operands = 0 : i64, tpu.core_type = #tpu.core_type<tc>, window_params = [{transform_indices = @transform_0, window_bounds = array<i64: 1, 8, 32>}, {transform_indices = @transform_1, window_bounds = array<i64: 1, 1, 128>}, {transform_indices = @transform_2, window_bounds = array<i64: 1, 1, 128>}, {transform_indices = @transform_3, window_bounds = array<i64: 32, 128>}, {transform_indices = @transform_4, window_bounds = array<i64: 1, 128>}, {transform_indices = @transform_5, window_bounds = array<i64: 1, 8, 128>}]} {
    %c0 = arith.constant 0 : index
    %c0_0 = arith.constant 0 : index
    %c0_1 = arith.constant 0 : index
    %0 = vector.load %arg3[%c0, %c0_0, %c0_1] : memref<1x8x32xf32, #tpu.memory_space<vmem>>, vector<1x8x32xf32>
    %1 = vector.shape_cast %0 : vector<1x8x32xf32> to vector<8x32xf32>
    %c0_2 = arith.constant 0 : index
    %c0_3 = arith.constant 0 : index
    %2 = vector.load %arg6[%c0_2, %c0_3] : memref<32x128xf32, #tpu.memory_space<vmem>>, vector<32x128xf32>
    %cst = arith.constant dense<0.000000e+00> : vector<8x128xf32>
    %3 = tpu.matmul %1, %2, %cst {dimension_numbers = #tpu.dot_dimension_numbers<[1], [0], [0], [1], [0, 0, 1, 1], [], []>} : vector<8x32xf32>, vector<32x128xf32>, vector<8x128xf32> -> vector<8x128xf32>
    %c0_4 = arith.constant 0 : index
    %c0_5 = arith.constant 0 : index
    %4 = vector.load %arg7[%c0_4, %c0_5] : memref<1x128xf32, #tpu.memory_space<vmem>>, vector<1x128xf32>
    %5 = vector.broadcast %4 : vector<1x128xf32> to vector<8x128xf32>
    %6 = arith.addf %3, %5 : vector<8x128xf32>
    %7 = math.sin %6 : vector<8x128xf32>
    %c0_6 = arith.constant 0 : index
    %c0_7 = arith.constant 0 : index
    %c0_8 = arith.constant 0 : index
    %8 = vector.load %arg4[%c0_6, %c0_7, %c0_8] : memref<1x1x128xf32, #tpu.memory_space<vmem>>, vector<1x1x128xf32>
    %9 = vector.shape_cast %8 : vector<1x1x128xf32> to vector<1x128xf32>
    %10 = vector.broadcast %9 : vector<1x128xf32> to vector<8x128xf32>
    %11 = arith.mulf %10, %7 : vector<8x128xf32>
    %c0_9 = arith.constant 0 : index
    %c0_10 = arith.constant 0 : index
    %c0_11 = arith.constant 0 : index
    %12 = vector.load %arg5[%c0_9, %c0_10, %c0_11] : memref<1x1x128xf32, #tpu.memory_space<vmem>>, vector<1x1x128xf32>
    %13 = vector.shape_cast %12 : vector<1x1x128xf32> to vector<1x128xf32>
    %14 = vector.broadcast %13 : vector<1x128xf32> to vector<8x128xf32>
    %15 = arith.addf %11, %14 : vector<8x128xf32>
    %c0_12 = arith.constant 0 : index
    %c0_13 = arith.constant 0 : index
    %c0_14 = arith.constant 0 : index
    %16 = vector.load %arg8[%c0_12, %c0_13, %c0_14] : memref<1x8x128xf32, #tpu.memory_space<vmem>>, vector<1x8x128xf32>
    %17 = vector.shape_cast %16 : vector<1x8x128xf32> to vector<8x128xf32>
    %18 = vector.shape_cast %15 : vector<8x128xf32> to vector<1x8x128xf32>
    tpu.vector_store %arg8[%c0_12, %c0_13, %c0_14], %18 {strides = array<i32>} : memref<1x8x128xf32, #tpu.memory_space<vmem>>, vector<1x8x128xf32>,
    return
  }
  func.func @transform_0(%arg0: i32, %arg1: i32, %arg2: i32) -> (i32, i32, i32) {
    %c0_i32 = arith.constant 0 : i32
    %c0_i32_0 = arith.constant 0 : i32
    return %arg0, %arg2, %c0_i32 : i32, i32, i32
  }
  func.func @transform_1(%arg0: i32, %arg1: i32, %arg2: i32) -> (i32, i32, i32) {
    %c0_i32 = arith.constant 0 : i32
    %c0_i32_0 = arith.constant 0 : i32
    return %arg0, %c0_i32, %arg1 : i32, i32, i32
  }
  func.func @transform_2(%arg0: i32, %arg1: i32, %arg2: i32) -> (i32, i32, i32) {
    %c0_i32 = arith.constant 0 : i32
    %c0_i32_0 = arith.constant 0 : i32
    return %arg0, %c0_i32, %arg1 : i32, i32, i32
  }
  func.func @transform_3(%arg0: i32, %arg1: i32, %arg2: i32) -> (i32, i32) {
    %c0_i32 = arith.constant 0 : i32
    %c0_i32_0 = arith.constant 0 : i32
    return %c0_i32, %arg1 : i32, i32
  }
  func.func @transform_4(%arg0: i32, %arg1: i32, %arg2: i32) -> (i32, i32) {
    %c0_i32 = arith.constant 0 : i32
    %c0_i32_0 = arith.constant 0 : i32
    return %c0_i32, %arg1 : i32, i32
  }
  func.func @transform_5(%arg0: i32, %arg1: i32, %arg2: i32) -> (i32, i32, i32) {
    %c0_i32 = arith.constant 0 : i32
    return %arg0, %arg2, %arg1 : i32, i32, i32
  }
}

</mosaic_0001>

<llo_original>
// kernel: tpu_custom_call.1
$region0: #{tpu_custom_call.1}
  #allocation0 [shape = 'u32[]', space=smem, size = 0x4, offset = 0x4, fixed_abs, tag = 'smem constant byte address 0x4 - core index']
  #allocation1 [shape = 'u32[144,128]{1,0:T(1,128)}', space=vmem, size = 0x12000, scoped, tag = 'internal scratch']
  %s0 = inlined_call_operand.hbm [shape: f32[2,8,32], index: 0, kind: input, shape index: {}]
  %s1 = inlined_call_operand.vmem [shape: f32[2,1,128], index: 1, kind: input, shape index: {}]
  %s2 = inlined_call_operand.vmem [shape: f32[2,1,128], index: 2, kind: input, shape index: {}]
  %s3 = inlined_call_operand.hbm [shape: f32[32,128], index: 3, kind: input, shape index: {}]
  %s4 = inlined_call_operand.vmem [shape: f32[1,128], index: 4, kind: input, shape index: {}]
  %s5 = inlined_call_operand.hbm [shape: f32[2,8,128], index: 5, kind: output, shape index: {}]
  %s6 = sld [smem:[#allocation0]]
  $region61: #{tpu_custom_call.1} parent=0
    _
  %s8 = ssub.s32 1, %s6
  %s9 = scalar_select 0, %s8, %s6
  $region1: #{tpu_custom_call.1} parent=0
    #allocation2 [shape = 'u8[8192]{0}', space=vmem, size = 0x2000, scoped, tag = 'input window, operand 0']
    #allocation3 [shape = 's32[2]{0}', space=sflag, size = 0x8, scoped, tag = 'scoped memory for tpu_custom_call.1']
    #allocation4 [shape = 's32[2]{0}', space=sflag, size = 0x8, scoped, tag = 'scoped memory for tpu_custom_call.1']
    #allocation5 [shape = 'u8[16384]{0}', space=vmem, size = 0x4000, scoped, tag = 'input window, operand 3, single buffered']
    #allocation6 [shape = 's32[1]{0}', space=sflag, size = 0x4, scoped, tag = 'scoped memory for tpu_custom_call.1']
    #allocation7 [shape = 'u8[8192]{0}', space=vmem, size = 0x2000, scoped, tag = 'output window, operand 0']
    %10 = vsyncpa [#allocation3], 0
    %s11 = scalar_lea.sflag [#allocation3], 1
    %12 = vsyncpa %s11, 0
    %13 = vsyncpa [#allocation6], 0
    %14 = vsyncpa [#allocation4], 0
    %s15 = scalar_lea.sflag [#allocation4], 1
    %16 = vsyncpa %s15, 0
    loop: start=0, step=1, limit=4
    $region2: #{tpu_custom_call.1} parent=1 // loop_pre_header
      _
    $region3: #{tpu_custom_call.1} parent=1 // loop_header
      %s18 = sphi 0, %s22
      %p19 = scmp.ge.s32.totalorder %s18, 4
      %s25 = sphi 0, %s44
      %s26 = sphi 0, %s40
      %s27 = sphi 0, %s36
      %s28 = sphi 0, %s25
      %s29 = sphi 0, %s26
      %s30 = sphi 0, %s27
      %s31 = sphi 0, %s28
      %s32 = sphi 0, %s29
      %s33 = sphi 0, %s30
      %s49 = sphi 0, %s51
      %s52 = sphi 0, %s49
      %s53 = sphi 0, %s52
      %s69 = sphi 0, %s53
      %s77 = sphi 0, %s79
      %s80 = sphi 0, %s77
      %s81 = sphi 0, %s80
      %s97 = sphi 0, %s81
      %s105 = sphi 0, %s107
      %s108 = sphi 0, %s105
      %s109 = sphi 0, %s108
      %s125 = sphi 0, %s109
      %s131 = sphi 0, %s133
      %s134 = sphi 0, %s131
      %s135 = sphi 0, %s134
      %s151 = sphi 0, %s135
      %s157 = sphi 0, %s159
      %s160 = sphi 0, %s157
      %s161 = sphi 0, %s160
      %s177 = sphi 0, %s161
      %s187 = sphi 0, %s189
      %s190 = sphi 0, %s187
      %s191 = sphi 0, %s190
      %s207 = sphi 0, %s191
    $region4: #{tpu_custom_call.1} parent=1 // loop_header_branch
      %21 = sbr.rel (%p19) target = $region8
    $region5: #{tpu_custom_call.1} parent=1 // loop_body
      %s23 = ssub.s32 %s18, 1
      %s24 = ssub.s32 %s18, 2
      %s34 = sadd.s32 1, %s27
      %p35 = scmp.ge.s32.totalorder %s34, 1
      %s36 = scalar_select %p35, 0, %s34
      %s37 = sadd.s32 1, %s26
      %s38 = scalar_select %p35, %s37, %s26
      %p39 = scmp.ge.s32.totalorder %s38, 1
      %s40 = scalar_select %p39, 0, %s38
      %s41 = sadd.s32 1, %s25
      %s42 = scalar_select %p39, %s41, %s25
      %p43 = scmp.ge.s32.totalorder %s42, 2
      %s44 = scalar_select %p43, 0, %s42
      %s45 = ssub.s32 %s25, %s44
      %s46 = ssub.s32 %s27, %s36
      %s47 = sor.u32 %s45, %s46
      %p48 = scmp.eq.s32.totalorder %s47, 0
      %s50 = sadd.s32 %s49, 1
      %s51 = scalar_select %p48, %s49, %s50
      %p54 = pneg %p48
      %p55 = scmp.eq.s32.totalorder %s18, 1
      %p56 = por %p54, %p55
      %p57 = scmp.ne.s32.totalorder %s49, %s52
      %p58 = scmp.eq.s32.totalorder %s18, 0
      %p59 = por %p57, %p58
      %p60 = scmp.ne.s32.totalorder %s49, %s52
      %p61 = scmp.eq.s32.totalorder %s23, 1
      %p62 = por %p60, %p61
      %p63 = scmp.ne.s32.totalorder %s52, %s53
      %p64 = scmp.eq.s32.totalorder %s23, 0
      %p65 = por %p63, %p64
      %p66 = scmp.ne.s32.totalorder %s52, %s53
      %p67 = scmp.eq.s32.totalorder %s24, 1
      %p68 = por %p66, %p67
      %p70 = scmp.ne.s32.totalorder %s53, %s69
      %p71 = scmp.eq.s32.totalorder %s24, 0
      %p72 = por %p70, %p71
      %s73 = ssub.s32 %s25, %s44
      %s74 = ssub.s32 %s26, %s40
      %s75 = sor.u32 %s73, %s74
      %p76 = scmp.eq.s32.totalorder %s75, 0
      %s78 = sadd.s32 %s77, 1
      %s79 = scalar_select %p76, %s77, %s78
      %p82 = pneg %p76
      %p83 = scmp.eq.s32.totalorder %s18, 1
      %p84 = por %p82, %p83
      %p85 = scmp.ne.s32.totalorder %s77, %s80
      %p86 = scmp.eq.s32.totalorder %s18, 0
      %p87 = por %p85, %p86
      %p88 = scmp.ne.s32.totalorder %s77, %s80
      %p89 = scmp.eq.s32.totalorder %s23, 1
      %p90 = por %p88, %p89
      %p91 = scmp.ne.s32.totalorder %s80, %s81
      %p92 = scmp.eq.s32.totalorder %s23, 0
      %p93 = por %p91, %p92
      %p94 = scmp.ne.s32.totalorder %s80, %s81
      %p95 = scmp.eq.s32.totalorder %s24, 1
      %p96 = por %p94, %p95
      %p98 = scmp.ne.s32.totalorder %s81, %s97
      %p99 = scmp.eq.s32.totalorder %s24, 0
      %p100 = por %p98, %p99
      %s101 = ssub.s32 %s25, %s44
      %s102 = ssub.s32 %s26, %s40
      %s103 = sor.u32 %s101, %s102
      %p104 = scmp.eq.s32.totalorder %s103, 0
      %s106 = sadd.s32 %s105, 1
      %s107 = scalar_select %p104, %s105, %s106
      %p110 = pneg %p104
      %p111 = scmp.eq.s32.totalorder %s18, 1
      %p112 = por %p110, %p111
      %p113 = scmp.ne.s32.totalorder %s105, %s108
      %p114 = scmp.eq.s32.totalorder %s18, 0
      %p115 = por %p113, %p114
      %p116 = scmp.ne.s32.totalorder %s105, %s108
      %p117 = scmp.eq.s32.totalorder %s23, 1
      %p118 = por %p116, %p117
      %p119 = scmp.ne.s32.totalorder %s108, %s109
      %p120 = scmp.eq.s32.totalorder %s23, 0
      %p121 = por %p119, %p120
      %p122 = scmp.ne.s32.totalorder %s108, %s109
      %p123 = scmp.eq.s32.totalorder %s24, 1
      %p124 = por %p122, %p123
      %p126 = scmp.ne.s32.totalorder %s109, %s125
      %p127 = scmp.eq.s32.totalorder %s24, 0
      %p128 = por %p126, %p127
      %s129 = ssub.s32 %s26, %s40
      %p130 = scmp.eq.s32.totalorder %s129, 0
      %s132 = sadd.s32 %s131, 1
      %s133 = scalar_select %p130, %s131, %s132
      %p136 = pneg %p130
      %p137 = scmp.eq.s32.totalorder %s18, 1
      %p138 = por %p136, %p137
      %p139 = scmp.ne.s32.totalorder %s131, %s134
      %p140 = scmp.eq.s32.totalorder %s18, 0
      %p141 = por %p139, %p140
      %p142 = scmp.ne.s32.totalorder %s131, %s134
      %p143 = scmp.eq.s32.totalorder %s23, 1
      %p144 = por %p142, %p143
      %p145 = scmp.ne.s32.totalorder %s134, %s135
      %p146 = scmp.eq.s32.totalorder %s23, 0
      %p147 = por %p145, %p146
      %p148 = scmp.ne.s32.totalorder %s134, %s135
      %p149 = scmp.eq.s32.totalorder %s24, 1
      %p150 = por %p148, %p149
      %p152 = scmp.ne.s32.totalorder %s135, %s151
      %p153 = scmp.eq.s32.totalorder %s24, 0
      %p154 = por %p152, %p153
      %s155 = ssub.s32 %s26, %s40
      %p156 = scmp.eq.s32.totalorder %s155, 0
      %s158 = sadd.s32 %s157, 1
      %s159 = scalar_select %p156, %s157, %s158
      %p162 = pneg %p156
      %p163 = scmp.eq.s32.totalorder %s18, 1
      %p164 = por %p162, %p163
      %p165 = scmp.ne.s32.totalorder %s157, %s160
      %p166 = scmp.eq.s32.totalorder %s18, 0
      %p167 = por %p165, %p166
      %p168 = scmp.ne.s32.totalorder %s157, %s160
      %p169 = scmp.eq.s32.totalorder %s23, 1
      %p170 = por %p168, %p169
      %p171 = scmp.ne.s32.totalorder %s160, %s161
      %p172 = scmp.eq.s32.totalorder %s23, 0
      %p173 = por %p171, %p172
      %p174 = scmp.ne.s32.totalorder %s160, %s161
      %p175 = scmp.eq.s32.totalorder %s24, 1
      %p176 = por %p174, %p175
      %p178 = scmp.ne.s32.totalorder %s161, %s177
      %p179 = scmp.eq.s32.totalorder %s24, 0
      %p180 = por %p178, %p179
      %s181 = ssub.s32 %s25, %s44
      %s182 = ssub.s32 %s27, %s36
      %s183 = sor.u32 %s181, %s182
      %s184 = ssub.s32 %s26, %s40
      %s185 = sor.u32 %s183, %s184
      %p186 = scmp.eq.s32.totalorder %s185, 0
      %s188 = sadd.s32 %s187, 1
      %s189 = scalar_select %p186, %s187, %s188
      %p192 = pneg %p186
      %p193 = scmp.eq.s32.totalorder %s18, 1
      %p194 = por %p192, %p193
      %p195 = scmp.ne.s32.totalorder %s187, %s190
      %p196 = scmp.eq.s32.totalorder %s18, 0
      %p197 = por %p195, %p196
      %p198 = scmp.ne.s32.totalorder %s187, %s190
      %p199 = scmp.eq.s32.totalorder %s23, 1
      %p200 = por %p198, %p199
      %p201 = scmp.ne.s32.totalorder %s190, %s191
      %p202 = scmp.eq.s32.totalorder %s23, 0
      %p203 = por %p201, %p202
      %p204 = scmp.ne.s32.totalorder %s190, %s191
      %p205 = scmp.eq.s32.totalorder %s24, 1
      %p206 = por %p204, %p205
      %p208 = scmp.ne.s32.totalorder %s191, %s207
      %p209 = scmp.eq.s32.totalorder %s24, 0
      %p210 = por %p208, %p209
      %p211 = scmp.le.s32.totalorder 1, %s18
      %p212 = scmp.lt.s32.totalorder %s18, 3
      %p213 = pnand %p211, %p212
      %p214 = pneg %p213
      // Predicated region
      $region9: #{tpu_custom_call.1} parent=5 // pred_check
        _
      $region10: #{tpu_custom_call.1} parent=5 // pred_check_branch
        %216 = sbr.rel (%p213) target = $region12
      $region11: #{tpu_custom_call.1} parent=5 // pred_region
        %s217 = ssub.s32 %s18, 1
        // Predicated region
        $region13: #{tpu_custom_call.1} parent=11 // pred_check
          %p218 = pneg %p147
        $region14: #{tpu_custom_call.1} parent=11 // pred_check_branch
          %220 = sbr.rel (%p218) target = $region16
        $region15: #{tpu_custom_call.1} parent=11 // pred_region
          %s222 = ssub.s32 512, 512
          %223 = vsyncadd [#allocation6], %s222
          %s224 = smul.addr %s29, 128
          %s225 = scalar_lea.hbm %s3, %s224
          %s226 = sshll.u32 [#allocation5], 4
          %s227 = int_to_ptr.vmem [resolvable:$true] %s226
          %232 = dma.hbm_to_vmem [thread:$0]  %s225, 512, %s227, [#allocation6], 128, 128, 8
        $region16: #{tpu_custom_call.1} parent=11 // pred_fallthru
          _
        // Predicated region
        $region17: #{tpu_custom_call.1} parent=11 // pred_check
          %p233 = pneg %p173
        $region18: #{tpu_custom_call.1} parent=11 // pred_check_branch
          %235 = sbr.rel (%p233) target = $region20
        $region19: #{tpu_custom_call.1} parent=11 // pred_region
          %p236 = scmp.lt.s32.totalorder %s29, 0
          %s237 = scalar_select %p236, %s29, 0
          %s238 = scalar_lea.vmem %s4, %s237
        $region20: #{tpu_custom_call.1} parent=11 // pred_fallthru
          _
      $region12: #{tpu_custom_call.1} parent=5 // pred_fallthru
        _
      %p239 = scmp.lt.s32.totalorder %s18, 2
      // Predicated region
      $region21: #{tpu_custom_call.1} parent=5 // pred_check
        %p240 = pneg %p239
      $region22: #{tpu_custom_call.1} parent=5 // pred_check_branch
        %242 = sbr.rel (%p240) target = $region24
      $region23: #{tpu_custom_call.1} parent=5 // pred_region
        // Predicated region
        $region25: #{tpu_custom_call.1} parent=23 // pred_check
          %p243 = pneg %p59
        $region26: #{tpu_custom_call.1} parent=23 // pred_check_branch
          %245 = sbr.rel (%p243) target = $region28
        $region27: #{tpu_custom_call.1} parent=23 // pred_region
          %s246 = sand.u32 %s49, 1
          %s247 = scalar_lea.sflag [#allocation3], %s246
          %s248 = sand.u32 %s49, 1
          %s249 = smul.addr %s248, 8
          %s250 = scalar_lea.vmem [#allocation2], %s249
          %s252 = ssub.s32 128, 128
          %253 = vsyncadd %s247, %s252
          %s254 = sadd.s32 %s27, %s25
          %s255 = smul.addr %s254, 128
          %s256 = scalar_lea.hbm %s0, %s255
          %s258 = sshll.u32 %s250, 4
          %s259 = int_to_ptr.vmem [resolvable:$true] %s258
          %261 = dma.hbm_to_vmem [thread:$0]  %s256, 128, %s259, %s247
        $region28: #{tpu_custom_call.1} parent=23 // pred_fallthru
          _
        // Predicated region
        $region29: #{tpu_custom_call.1} parent=23 // pred_check
          %p262 = pneg %p87
        $region30: #{tpu_custom_call.1} parent=23 // pred_check_branch
          %264 = sbr.rel (%p262) target = $region32
        $region31: #{tpu_custom_call.1} parent=23 // pred_region
          %p265 = scmp.lt.s32.totalorder %s25, 1
          %s266 = scalar_select %p265, %s25, 1
          %p267 = scmp.lt.s32.totalorder %s26, 0
          %s268 = scalar_select %p267, %s26, 0
          %s269 = sadd.s32 %s268, %s266
          %s270 = scalar_lea.vmem %s1, %s269
        $region32: #{tpu_custom_call.1} parent=23 // pred_fallthru
          _
        // Predicated region
        $region33: #{tpu_custom_call.1} parent=23 // pred_check
          %p271 = pneg %p115
        $region34: #{tpu_custom_call.1} parent=23 // pred_check_branch
          %273 = sbr.rel (%p271) target = $region36
        $region35: #{tpu_custom_call.1} parent=23 // pred_region
          %p274 = scmp.lt.s32.totalorder %s25, 1
          %s275 = scalar_select %p274, %s25, 1
          %p276 = scmp.lt.s32.totalorder %s26, 0
          %s277 = scalar_select %p276, %s26, 0
          %s278 = sadd.s32 %s277, %s275
          %s279 = scalar_lea.vmem %s2, %s278
        $region36: #{tpu_custom_call.1} parent=23 // pred_fallthru
          _
      $region24: #{tpu_custom_call.1} parent=5 // pred_fallthru
        _
      %p280 = scmp.le.s32.totalorder 1, %s18
      %p281 = scmp.lt.s32.totalorder %s18, 3
      %p282 = pnand %p280, %p281
      %p283 = pneg %p282
      // Predicated region
      $region37: #{tpu_custom_call.1} parent=5 // pred_check
        _
      $region38: #{tpu_custom_call.1} parent=5 // pred_check_branch
        %285 = sbr.rel (%p282) target = $region40
      $region39: #{tpu_custom_call.1} parent=5 // pred_region
        %s286 = ssub.s32 %s18, 1
        %s287 = sand.u32 %s52, 1
        %s288 = scalar_lea.sflag [#allocation3], %s287
        %s289 = sand.u32 %s52, 1
        %s290 = smul.addr %s289, 8
        %s291 = scalar_lea.vmem [#allocation2], %s290
        // Predicated region
        $region41: #{tpu_custom_call.1} parent=39 // pred_check
          %p292 = pneg %p65
        $region42: #{tpu_custom_call.1} parent=39 // pred_check_branch
          %294 = sbr.rel (%p292) target = $region44
        $region43: #{tpu_custom_call.1} parent=39 // pred_region
          %295 = dma.done %s288, 128
        $region44: #{tpu_custom_call.1} parent=39 // pred_fallthru
          _
        // Predicated region
        $region45: #{tpu_custom_call.1} parent=39 // pred_check
          %p296 = pneg %p147
        $region46: #{tpu_custom_call.1} parent=39 // pred_check_branch
          %298 = sbr.rel (%p296) target = $region48
        $region47: #{tpu_custom_call.1} parent=39 // pred_region
          %299 = dma.done [#allocation6], 512
        $region48: #{tpu_custom_call.1} parent=39 // pred_fallthru
          _
        %s300 = sand.u32 %s52, 1
        %s301 = scalar_lea.sflag [#allocation3], %s300
        %s302 = sand.u32 %s52, 1
        %s303 = smul.addr %s302, 8
        %s304 = scalar_lea.vmem [#allocation2], %s303
        %p305 = pneg %p65
        %p306 = pneg %p62
        %p307 = scmp.lt.s32.totalorder %s28, 1
        %s308 = scalar_select %p307, %s28, 1
        %p309 = scmp.lt.s32.totalorder %s29, 0
        %s310 = scalar_select %p309, %s29, 0
        %s311 = sadd.s32 %s310, %s308
        %s312 = scalar_lea.vmem %s1, %s311
        %p313 = pneg %p93
        %p314 = pneg %p90
        %p315 = scmp.lt.s32.totalorder %s28, 1
        %s316 = scalar_select %p315, %s28, 1
        %p317 = scmp.lt.s32.totalorder %s29, 0
        %s318 = scalar_select %p317, %s29, 0
        %s319 = sadd.s32 %s318, %s316
        %s320 = scalar_lea.vmem %s2, %s319
        %p321 = pneg %p121
        %p322 = pneg %p118
        %p323 = pneg %p147
        %p324 = pneg %p144
        %p325 = scmp.lt.s32.totalorder %s29, 0
        %s326 = scalar_select %p325, %s29, 0
        %s327 = scalar_lea.vmem %s4, %s326
        %p328 = pneg %p173
        %p329 = pneg %p170
        %p330 = pneg %p203
        %p331 = pneg %p200
        %s332 = sand.u32 %s190, 1
        %s333 = scalar_lea.sflag [#allocation4], %s332
        %s334 = sand.u32 %s190, 1
        %s335 = smul.addr %s334, 8
        %s336 = scalar_lea.vmem [#allocation7], %s335
        %p337 = scmp.lt.s32.totalorder %s28, 1
        %s338 = scalar_select %p337, %s28, 1
        %p339 = scmp.lt.s32.totalorder %s29, 0
        %s340 = scalar_select %p339, %s29, 0
        %s341 = sadd.s32 %s340, %s338
        %s342 = scalar_lea.vmem %s1, %s341
        %p343 = scmp.lt.s32.totalorder %s28, 1
        %s344 = scalar_select %p343, %s28, 1
        %p345 = scmp.lt.s32.totalorder %s29, 0
        %s346 = scalar_select %p345, %s29, 0
        %s347 = sadd.s32 %s346, %s344
        %s348 = scalar_lea.vmem %s2, %s347
        %p349 = scmp.lt.s32.totalorder %s29, 0
        %s350 = scalar_select %p349, %s29, 0
        %s351 = scalar_lea.vmem %s4, %s350
        %v352 = vld [vmem:[%s291] sm:$0xff]
        %v353 = vld [vmem:[#allocation5] sm:$0xff]
        %v354 = vld [vmem:[#allocation5 + $0x8] sm:$0xff]
        %v355 = vld [vmem:[#allocation5 + $0x10] sm:$0xff]
        %v356 = vld [vmem:[#allocation5 + $0x18] sm:$0xff]
        %v357 = vld [vmem:[%s351] sm:$0x1]
        %v359 = vlaneseq
        %v360 = vshrl.u32 %v359, 7
        %v361 = vsub.s32 0, %v360
        %v362 = vrot.slane %v357, %v361
        %vm364 = vcmask 261120
        %v366 = vsel %vm364, %v352, 0
        %368 = vmatprep.subr.mxu0 0.0
        %369 = vmatpush1.msra.mxu0 %v353
        %370 = vmatprep.subr.mxu0 0.0
        %371 = vmatpush1.msra.mxu0 %v354
        %372 = vmatprep.subr.mxu0 0.0
        %373 = vmatpush1.msra.mxu0 %v355
        %374 = vmatprep.subr.mxu0 0.0
        %375 = vmatpush1.msra.mxu0 %v356
        %376 = vmatprep.subr.mxu0 0.0
        %377 = vmatpush1.msra.mxu0 0.0
        %378 = vmatprep.subr.mxu0 0.0
        %379 = vmatpush1.msra.mxu0 0.0
        %380 = vmatprep.subr.mxu0 0.0
        %381 = vmatpush1.msra.mxu0 0.0
        %382 = vmatprep.subr.mxu0 0.0
        %383 = vmatpush1.msra.mxu0 0.0
        %384 = vmatprep.subr.mxu0 0.0
        %385 = vmatpush1.msra.mxu0 0.0
        %386 = vmatprep.subr.mxu0 0.0
        %387 = vmatpush1.msra.mxu0 0.0
        %388 = vmatprep.subr.mxu0 0.0
        %389 = vmatpush1.msra.mxu0 0.0
        %390 = vmatprep.subr.mxu0 0.0
        %391 = vmatpush1.msra.mxu0 0.0
        %392 = vmatprep.subr.mxu0 0.0
        %393 = vmatpush1.msra.mxu0 0.0
        %394 = vmatprep.subr.mxu0 0.0
        %395 = vmatpush1.msra.mxu0 0.0
        %396 = vmatprep.subr.mxu0 0.0
        %397 = vmatpush1.msra.mxu0 0.0
        %398 = vmatprep.subr.mxu0 0.0
        %399 = vmatpush1.msra.mxu0 0.0
        %400 = vmatprep.subr.mxu0 0.0
        %401 = vmatpush1.msra.mxu0 0.0
        %402 = vmatprep.subr.mxu0 0.0
        %403 = vmatpush1.msra.mxu0 0.0
        %404 = vmatprep.subr.mxu0 0.0
        %405 = vmatpush1.msra.mxu0 0.0
        %406 = vmatprep.subr.mxu0 0.0
        %407 = vmatpush1.msra.mxu0 0.0
        %408 = vmatprep.subr.mxu0 0.0
        %409 = vmatpush1.msra.mxu0 0.0
        %410 = vmatprep.subr.mxu0 0.0
        %411 = vmatpush1.msra.mxu0 0.0
        %412 = vmatprep.subr.mxu0 0.0
        %413 = vmatpush1.msra.mxu0 0.0
        %414 = vmatprep.subr.mxu0 0.0
        %415 = vmatpush1.msra.mxu0 0.0
        %416 = vmatprep.subr.mxu0 0.0
        %417 = vmatpush1.msra.mxu0 0.0
        %418 = vmatprep.subr.mxu0 0.0
        %419 = vmatpush1.msra.mxu0 0.0
        %420 = vmatprep.subr.mxu0 0.0
        %421 = vmatpush1.msra.mxu0 0.0
        %422 = vmatprep.subr.mxu0 0.0
        %423 = vmatpush1.msra.mxu0 0.0
        %424 = vmatprep.subr.mxu0 0.0
        %425 = vmatpush1.msra.mxu0 0.0
        %426 = vmatprep.subr.mxu0 0.0
        %427 = vmatpush1.msra.mxu0 0.0
        %428 = vmatprep.subr.mxu0 0.0
        %429 = vmatpush1.msra.mxu0 0.0
        %430 = vmatprep.subr.mxu0 0.0
        %431 = vmatpush1.msra.mxu0 0.0
        %432 = vmatprep.mubr.f32.mxu0 0.0
        %433 = vmatmul.mubr.f32.gmra.mrb[0].mxu0 %v366
        %v434 = vpop.f32.mrb[0].mxu0
        %v435 = vadd.f32 %v362, %v434
        %v436 = vpop.f32.mrb[0].mxu0
        %437 = vdwg.mxu0
        %v438 = vand.u32 2147483647, %v435
        %vm439 = vcmp.le.f32.partialorder %v438, 0.7853982
        %vm440 = vcmp.lt.s32.totalorder %v435, 0
        %v441 = vand.u32 %v435, 2139095040
        %v442 = vshrl.u32 %v441, 23
        %v443 = vsub.s32 %v442, 127
        %v444 = vand.u32 2147483647, %v435
        %v445 = vand.u32 %v444, 8388607
        %v446 = vor.u32 %v445, 8388608
        %v447 = vsub.s32 0, %v446
        %v448 = vadd.s32 %v443, 1
        %vm449 = vcmp.gt.s32.totalorder %v448, 0
        %v450 = vsel %vm449, %v448, 0
        %v451 = vshrl.u32 %v450, 5
        %v452 = vand.u32 %v450, 31
        %v453 = vsub.s32 32, %v452
        %v454 = vshrl.u32 683565275, %v453
        %v455 = vshll.u32 683565275, %v452
        %v456 = vshrl.u32 2475754826, %v453
        %v457 = vor.u32 %v455, %v456
        %v458 = vshll.u32 2475754826, %v452
        %v459 = vshrl.u32 2131351028, %v453
        %v460 = vor.u32 %v458, %v459
        %v461 = vshll.u32 2131351028, %v452
        %v462 = vshrl.u32 2102212464, %v453
        %v463 = vor.u32 %v461, %v462
        %v464 = vshll.u32 2102212464, %v452
        %v465 = vshrl.u32 920167782, %v453
        %v466 = vor.u32 %v464, %v465
        %v467 = vshll.u32 920167782, %v452
        %v468 = vshrl.u32 1326507024, %v453
        %v469 = vor.u32 %v467, %v468
        %vm470 = vcmp.lt.s32.totalorder %v451, 1
        %vm471 = vcmp.lt.s32.totalorder %v451, 2
        %vm472 = vcmp.lt.s32.totalorder %v451, 3
        %vm473 = vcmp.lt.s32.totalorder %v451, 4
        %v474 = vsel %vm470, %v454, %v457
        %v475 = vsel %vm473, %v463, 2102212464
        %v476 = vsel %vm472, %v460, %v475
        %v477 = vsel %vm471, %v474, %v476
        %v478 = vsel %vm470, %v457, %v460
        %v479 = vsel %vm473, %v466, 920167782
        %v480 = vsel %vm472, %v463, %v479
        %v481 = vsel %vm471, %v478, %v480
        %v482 = vsel %vm470, %v460, %v463
        %v483 = vsel %vm473, %v469, 1326507024
        %v484 = vsel %vm472, %v466, %v483
        %v485 = vsel %vm471, %v482, %v484
        %v486 = vshll.u32 %v446, 8
        %v487 = vmul.u32.u64.compose %v486, %v485
        %v488 = vextract.low.u32 %v487
        %v489 = vextract.high.u32 %v487
        %v490 = vmul.u32.u64.compose %v486, %v481
        %v491 = vextract.low.u32 %v490
        %v492 = vextract.high.u32 %v490
        %v493 = vmul.u32 %v486, %v477
        %v494 = vadd.s32 %v489, %v491
        %vm495 = vc.u32 %v489, %v491
        %v496 = vadd.s32 %v492, 1
        %v497 = vsel %vm495, %v496, %v492
        %v498 = vadd.s32 %v493, %v497
        %v499 = vadd.s32 %v498, 536870912
        %v500 = vshrl.u32 %v499, 30
        %v501 = vshll.u32 %v500, 30
        %v502 = vsub.s32 %v498, %v501
        %vm503 = vcmp.lt.s32.totalorder %v502, 0
        %v504 = vsub.s32 0, %v502
        %v505 = vsel %vm503, %v504, %v502
        %v506 = vclz %v505
        %v507 = vsub.s32 %v506, 2
        %vm508 = vcmp.gt.s32.totalorder 0, %v507
        %v509 = vsel %vm508, 0, %v507
        %v510 = vsub.s32 32, %v509
        %v511 = vshll.u32 %v502, %v509
        %v512 = vshrl.u32 %v494, %v510
        %v513 = vor.u32 %v511, %v512
        %v514 = vsub.s32 4294967266, %v509
        %v515 = vadd.s32 %v514, 127
        %v516 = vshll.u32 %v515, 23
        %v517 = vor.u32 4788187, %v516
        %v518 = vand.u32 2147483647, %v517
        %v520 = vcvt.s32.f32 %v513
        %v521 = vmul.f32 %v520, %v518
        %v522 = vxor.u32 %v521, 2147483648
        %v523 = vsel %vm440, %v522, %v521
        %v524 = vsub.s32 4, %v500
        %v525 = vsel %vm440, %v524, %v500
        %v526 = vsel %vm439, %v435, %v523
        %v527 = vsel %vm439, 0, %v525
        %v528 = vcosq.f32.pop %v526
        %v529 = vsinq.f32.pop %v526
        %vm530 = vweird.f32 %v435
        %v531 = vadd.s32 %v527, 3
        %v532 = vand.u32 %v531, 3
        %vm533 = vcmp.lt.s32.totalorder %v532, 2
        %vm534 = vcmp.eq.s32.totalorder %v532, 0
        %v535 = vxor.u32 %v529, 2147483648
        %v536 = vsel %vm534, %v528, %v535
        %vm537 = vcmp.eq.s32.totalorder %v532, 2
        %v538 = vxor.u32 %v528, 2147483648
        %v539 = vsel %vm537, %v538, %v529
        %v540 = vsel %vm533, %v536, %v539
        %v541 = vsel %vm530, nan, %v540
        %v542 = vld [vmem:[%s342] sm:$0x1]
        %v544 = vlaneseq
        %v545 = vshrl.u32 %v544, 7
        %v546 = vsub.s32 0, %v545
        %v547 = vrot.slane %v542, %v546
        %v549 = vmul.f32 %v547, %v541
        %v550 = vld [vmem:[%s348] sm:$0x1]
        %v552 = vlaneseq
        %v553 = vshrl.u32 %v552, 7
        %v554 = vsub.s32 0, %v553
        %v555 = vrot.slane %v550, %v554
        %v557 = vadd.f32 %v549, %v555
        %558 = vst [vmem:[%s336] sm:$0xff] %v557
        %s559 = sand.u32 %s190, 1
        %s560 = scalar_lea.sflag [#allocation4], %s559
        %s561 = sand.u32 %s190, 1
        %s562 = smul.addr %s561, 8
        %s563 = scalar_lea.vmem [#allocation7], %s562
        // Predicated region
        $region49: #{tpu_custom_call.1} parent=39 // pred_check
          %p564 = pneg %p200
        $region50: #{tpu_custom_call.1} parent=39 // pred_check_branch
          %566 = sbr.rel (%p564) target = $region52
        $region51: #{tpu_custom_call.1} parent=39 // pred_region
          %s568 = ssub.s32 128, 128
          %569 = vsyncadd %s560, %s568
          %s570 = sadd.s32 %s29, %s30
          %s571 = sadd.s32 %s570, %s28
          %s572 = smul.addr %s571, 128
          %s573 = scalar_lea.hbm %s5, %s572
          %s575 = sshll.u32 %s563, 4
          %s576 = int_to_ptr.vmem [resolvable:$true] %s575
          %578 = dma.vmem_to_hbm [thread:$0]  %s576, 128, %s573, %s560
        $region52: #{tpu_custom_call.1} parent=39 // pred_fallthru
          _
      $region40: #{tpu_custom_call.1} parent=5 // pred_fallthru
        _
      %p579 = scmp.le.s32.totalorder 2, %s18
      // Predicated region
      $region53: #{tpu_custom_call.1} parent=5 // pred_check
        %p580 = pneg %p579
      $region54: #{tpu_custom_call.1} parent=5 // pred_check_branch
        %582 = sbr.rel (%p580) target = $region56
      $region55: #{tpu_custom_call.1} parent=5 // pred_region
        %s583 = ssub.s32 %s18, 2
        // Predicated region
        $region57: #{tpu_custom_call.1} parent=55 // pred_check
          %p584 = pneg %p206
        $region58: #{tpu_custom_call.1} parent=55 // pred_check_branch
          %586 = sbr.rel (%p584) target = $region60
        $region59: #{tpu_custom_call.1} parent=55 // pred_region
          %s587 = sand.u32 %s191, 1
          %s588 = scalar_lea.sflag [#allocation4], %s587
          %s589 = sand.u32 %s191, 1
          %s590 = smul.addr %s589, 8
          %s591 = scalar_lea.vmem [#allocation7], %s590
          %592 = dma.done %s588, 128
        $region60: #{tpu_custom_call.1} parent=55 // pred_fallthru
          _
      $region56: #{tpu_custom_call.1} parent=5 // pred_fallthru
        _
    $region6: #{tpu_custom_call.1} parent=1 // loop_footer
      %s22 = sadd.s32 1, %s18
    $region7: #{tpu_custom_call.1} parent=1 // loop_footer_branch
      %17 = sbr.rel target = $region3
    $region8: #{tpu_custom_call.1} parent=1 // loop_exit
      _
    %593 = vsyncpa [#allocation3], 1
    %s594 = scalar_lea.sflag [#allocation3], 1
    %595 = vsyncpa %s594, 1
    %596 = vsyncpa [#allocation6], 1
    %597 = vsyncpa [#allocation4], 1
    %s598 = scalar_lea.sflag [#allocation4], 1
    %599 = vsyncpa %s598, 1

// kernel: tpu_custom_call.1
$region0: #{tpu_custom_call.1}
  #allocation0 [shape = 'u32[]', space=smem, size = 0x4, offset = 0x4, fixed_abs, tag = 'smem constant byte address 0x4 - core index']
  #allocation1 [shape = 'u32[144,128]{1,0:T(1,128)}', space=vmem, size = 0x12000, scoped, tag = 'internal scratch']
  %s0 = inlined_call_operand.hbm [shape: f32[2,8,32], index: 0, kind: input, shape index: {}]
  %s1 = inlined_call_operand.vmem [shape: f32[2,1,128], index: 1, kind: input, shape index: {}]
  %s2 = inlined_call_operand.vmem [shape: f32[2,1,128], index: 2, kind: input, shape index: {}]
  %s3 = inlined_call_operand.hbm [shape: f32[32,128], index: 3, kind: input, shape index: {}]
  %s4 = inlined_call_operand.vmem [shape: f32[1,128], index: 4, kind: input, shape index: {}]
  %s5 = inlined_call_operand.hbm [shape: f32[2,8,128], index: 5, kind: output, shape index: {}]
  %s6 = sld [smem:[#allocation0]]
  $region61: #{tpu_custom_call.1} parent=0
    _
  %s8 = ssub.s32 1, %s6
  %s9 = scalar_select 0, %s8, %s6
  $region1: #{tpu_custom_call.1} parent=0
    #allocation2 [shape = 'u8[8192]{0}', space=vmem, size = 0x2000, scoped, tag = 'input window, operand 0']
    #allocation3 [shape = 's32[2]{0}', space=sflag, size = 0x8, scoped, tag = 'scoped memory for tpu_custom_call.1']
    #allocation4 [shape = 's32[2]{0}', space=sflag, size = 0x8, scoped, tag = 'scoped memory for tpu_custom_call.1']
    #allocation5 [shape = 'u8[16384]{0}', space=vmem, size = 0x4000, scoped, tag = 'input window, operand 3, single buffered']
    #allocation6 [shape = 's32[1]{0}', space=sflag, size = 0x4, scoped, tag = 'scoped memory for tpu_custom_call.1']
    #allocation7 [shape = 'u8[8192]{0}', space=vmem, size = 0x2000, scoped, tag = 'output window, operand 0']
    %10 = vsyncpa [#allocation3], 0
    %s11 = scalar_lea.sflag [#allocation3], 1
    %12 = vsyncpa %s11, 0
    %13 = vsyncpa [#allocation6], 0
    %14 = vsyncpa [#allocation4], 0
    %s15 = scalar_lea.sflag [#allocation4], 1
    %16 = vsyncpa %s15, 0
    loop: start=0, step=1, limit=4
    $region2: #{tpu_custom_call.1} parent=1 // loop_pre_header
      _
    $region3: #{tpu_custom_call.1} parent=1 // loop_header
      %s18 = sphi 0, %s22
      %p19 = scmp.ge.s32.totalorder %s18, 4
      %s25 = sphi 0, %s44
      %s26 = sphi 0, %s40
      %s27 = sphi 0, %s36
      %s28 = sphi 0, %s25
      %s29 = sphi 0, %s26
      %s30 = sphi 0, %s27
      %s31 = sphi 0, %s28
      %s32 = sphi 0, %s29
      %s33 = sphi 0, %s30
      %s49 = sphi 0, %s51
      %s52 = sphi 0, %s49
      %s53 = sphi 0, %s52
      %s69 = sphi 0, %s53
      %s77 = sphi 0, %s79
      %s80 = sphi 0, %s77
      %s81 = sphi 0, %s80
      %s97 = sphi 0, %s81
      %s105 = sphi 0, %s107
      %s108 = sphi 0, %s105
      %s109 = sphi 0, %s108
      %s125 = sphi 0, %s109
      %s131 = sphi 0, %s133
      %s134 = sphi 0, %s131
      %s135 = sphi 0, %s134
      %s151 = sphi 0, %s135
      %s157 = sphi 0, %s159
      %s160 = sphi 0, %s157
      %s161 = sphi 0, %s160
      %s177 = sphi 0, %s161
      %s187 = sphi 0, %s189
      %s190 = sphi 0, %s187
      %s191 = sphi 0, %s190
      %s207 = sphi 0, %s191
    $region4: #{tpu_custom_call.1} parent=1 // loop_header_branch
      %21 = sbr.rel (%p19) target = $region8
    $region5: #{tpu_custom_call.1} parent=1 // loop_body
      %s23 = ssub.s32 %s18, 1
      %s24 = ssub.s32 %s18, 2
      %s34 = sadd.s32 1, %s27
      %p35 = scmp.ge.s32.totalorder %s34, 1
      %s36 = scalar_select %p35, 0, %s34
      %s37 = sadd.s32 1, %s26
      %s38 = scalar_select %p35, %s37, %s26
      %p39 = scmp.ge.s32.totalorder %s38, 1
      %s40 = scalar_select %p39, 0, %s38
      %s41 = sadd.s32 1, %s25
      %s42 = scalar_select %p39, %s41, %s25
      %p43 = scmp.ge.s32.totalorder %s42, 2
      %s44 = scalar_select %p43, 0, %s42
      %s45 = ssub.s32 %s25, %s44
      %s46 = ssub.s32 %s27, %s36
      %s47 = sor.u32 %s45, %s46
      %p48 = scmp.eq.s32.totalorder %s47, 0
      %s50 = sadd.s32 %s49, 1
      %s51 = scalar_select %p48, %s49, %s50
      %p54 = pneg %p48
      %p55 = scmp.eq.s32.totalorder %s18, 1
      %p56 = por %p54, %p55
      %p57 = scmp.ne.s32.totalorder %s49, %s52
      %p58 = scmp.eq.s32.totalorder %s18, 0
      %p59 = por %p57, %p58
      %p60 = scmp.ne.s32.totalorder %s49, %s52
      %p61 = scmp.eq.s32.totalorder %s23, 1
      %p62 = por %p60, %p61
      %p63 = scmp.ne.s32.totalorder %s52, %s53
      %p64 = scmp.eq.s32.totalorder %s23, 0
      %p65 = por %p63, %p64
      %p66 = scmp.ne.s32.totalorder %s52, %s53
      %p67 = scmp.eq.s32.totalorder %s24, 1
      %p68 = por %p66, %p67
      %p70 = scmp.ne.s32.totalorder %s53, %s69
      %p71 = scmp.eq.s32.totalorder %s24, 0
      %p72 = por %p70, %p71
      %s73 = ssub.s32 %s25, %s44
      %s74 = ssub.s32 %s26, %s40
      %s75 = sor.u32 %s73, %s74
      %p76 = scmp.eq.s32.totalorder %s75, 0
      %s78 = sadd.s32 %s77, 1
      %s79 = scalar_select %p76, %s77, %s78
      %p82 = pneg %p76
      %p83 = scmp.eq.s32.totalorder %s18, 1
      %p84 = por %p82, %p83
      %p85 = scmp.ne.s32.totalorder %s77, %s80
      %p86 = scmp.eq.s32.totalorder %s18, 0
      %p87 = por %p85, %p86
      %p88 = scmp.ne.s32.totalorder %s77, %s80
      %p89 = scmp.eq.s32.totalorder %s23, 1
      %p90 = por %p88, %p89
      %p91 = scmp.ne.s32.totalorder %s80, %s81
      %p92 = scmp.eq.s32.totalorder %s23, 0
      %p93 = por %p91, %p92
      %p94 = scmp.ne.s32.totalorder %s80, %s81
      %p95 = scmp.eq.s32.totalorder %s24, 1
      %p96 = por %p94, %p95
      %p98 = scmp.ne.s32.totalorder %s81, %s97
      %p99 = scmp.eq.s32.totalorder %s24, 0
      %p100 = por %p98, %p99
      %s101 = ssub.s32 %s25, %s44
      %s102 = ssub.s32 %s26, %s40
      %s103 = sor.u32 %s101, %s102
      %p104 = scmp.eq.s32.totalorder %s103, 0
      %s106 = sadd.s32 %s105, 1
      %s107 = scalar_select %p104, %s105, %s106
      %p110 = pneg %p104
      %p111 = scmp.eq.s32.totalorder %s18, 1
      %p112 = por %p110, %p111
      %p113 = scmp.ne.s32.totalorder %s105, %s108
      %p114 = scmp.eq.s32.totalorder %s18, 0
      %p115 = por %p113, %p114
      %p116 = scmp.ne.s32.totalorder %s105, %s108
      %p117 = scmp.eq.s32.totalorder %s23, 1
      %p118 = por %p116, %p117
      %p119 = scmp.ne.s32.totalorder %s108, %s109
      %p120 = scmp.eq.s32.totalorder %s23, 0
      %p121 = por %p119, %p120
      %p122 = scmp.ne.s32.totalorder %s108, %s109
      %p123 = scmp.eq.s32.totalorder %s24, 1
      %p124 = por %p122, %p123
      %p126 = scmp.ne.s32.totalorder %s109, %s125
      %p127 = scmp.eq.s32.totalorder %s24, 0
      %p128 = por %p126, %p127
      %s129 = ssub.s32 %s26, %s40
      %p130 = scmp.eq.s32.totalorder %s129, 0
      %s132 = sadd.s32 %s131, 1
      %s133 = scalar_select %p130, %s131, %s132
      %p136 = pneg %p130
      %p137 = scmp.eq.s32.totalorder %s18, 1
      %p138 = por %p136, %p137
      %p139 = scmp.ne.s32.totalorder %s131, %s134
      %p140 = scmp.eq.s32.totalorder %s18, 0
      %p141 = por %p139, %p140
      %p142 = scmp.ne.s32.totalorder %s131, %s134
      %p143 = scmp.eq.s32.totalorder %s23, 1
      %p144 = por %p142, %p143
      %p145 = scmp.ne.s32.totalorder %s134, %s135
      %p146 = scmp.eq.s32.totalorder %s23, 0
      %p147 = por %p145, %p146
      %p148 = scmp.ne.s32.totalorder %s134, %s135
      %p149 = scmp.eq.s32.totalorder %s24, 1
      %p150 = por %p148, %p149
      %p152 = scmp.ne.s32.totalorder %s135, %s151
      %p153 = scmp.eq.s32.totalorder %s24, 0
      %p154 = por %p152, %p153
      %s155 = ssub.s32 %s26, %s40
      %p156 = scmp.eq.s32.totalorder %s155, 0
      %s158 = sadd.s32 %s157, 1
      %s159 = scalar_select %p156, %s157, %s158
      %p162 = pneg %p156
      %p163 = scmp.eq.s32.totalorder %s18, 1
      %p164 = por %p162, %p163
      %p165 = scmp.ne.s32.totalorder %s157, %s160
      %p166 = scmp.eq.s32.totalorder %s18, 0
      %p167 = por %p165, %p166
      %p168 = scmp.ne.s32.totalorder %s157, %s160
      %p169 = scmp.eq.s32.totalorder %s23, 1
      %p170 = por %p168, %p169
      %p171 = scmp.ne.s32.totalorder %s160, %s161
      %p172 = scmp.eq.s32.totalorder %s23, 0
      %p173 = por %p171, %p172
      %p174 = scmp.ne.s32.totalorder %s160, %s161
      %p175 = scmp.eq.s32.totalorder %s24, 1
      %p176 = por %p174, %p175
      %p178 = scmp.ne.s32.totalorder %s161, %s177
      %p179 = scmp.eq.s32.totalorder %s24, 0
      %p180 = por %p178, %p179
      %s181 = ssub.s32 %s25, %s44
      %s182 = ssub.s32 %s27, %s36
      %s183 = sor.u32 %s181, %s182
      %s184 = ssub.s32 %s26, %s40
      %s185 = sor.u32 %s183, %s184
      %p186 = scmp.eq.s32.totalorder %s185, 0
      %s188 = sadd.s32 %s187, 1
      %s189 = scalar_select %p186, %s187, %s188
      %p192 = pneg %p186
      %p193 = scmp.eq.s32.totalorder %s18, 1
      %p194 = por %p192, %p193
      %p195 = scmp.ne.s32.totalorder %s187, %s190
      %p196 = scmp.eq.s32.totalorder %s18, 0
      %p197 = por %p195, %p196
      %p198 = scmp.ne.s32.totalorder %s187, %s190
      %p199 = scmp.eq.s32.totalorder %s23, 1
      %p200 = por %p198, %p199
      %p201 = scmp.ne.s32.totalorder %s190, %s191
      %p202 = scmp.eq.s32.totalorder %s23, 0
      %p203 = por %p201, %p202
      %p204 = scmp.ne.s32.totalorder %s190, %s191
      %p205 = scmp.eq.s32.totalorder %s24, 1
      %p206 = por %p204, %p205
      %p208 = scmp.ne.s32.totalorder %s191, %s207
      %p209 = scmp.eq.s32.totalorder %s24, 0
      %p210 = por %p208, %p209
      %p211 = scmp.le.s32.totalorder 1, %s18
      %p212 = scmp.lt.s32.totalorder %s18, 3
      %p213 = pnand %p211, %p212
      %p214 = pneg %p213
      // Predicated region
      $region9: #{tpu_custom_call.1} parent=5 // pred_check
        _
      $region10: #{tpu_custom_call.1} parent=5 // pred_check_branch
        %216 = sbr.rel (%p213) target = $region12
      $region11: #{tpu_custom_call.1} parent=5 // pred_region
        %s217 = ssub.s32 %s18, 1
        // Predicated region
        $region13: #{tpu_custom_call.1} parent=11 // pred_check
          %p218 = pneg %p147
        $region14: #{tpu_custom_call.1} parent=11 // pred_check_branch
          %220 = sbr.rel (%p218) target = $region16
        $region15: #{tpu_custom_call.1} parent=11 // pred_region
          %s222 = ssub.s32 512, 512
          %223 = vsyncadd [#allocation6], %s222
          %s224 = smul.addr %s29, 128
          %s225 = scalar_lea.hbm %s3, %s224
          %s226 = sshll.u32 [#allocation5], 4
          %s227 = int_to_ptr.vmem [resolvable:$true] %s226
          %232 = dma.hbm_to_vmem [thread:$0]  %s225, 512, %s227, [#allocation6], 128, 128, 8
        $region16: #{tpu_custom_call.1} parent=11 // pred_fallthru
          _
        // Predicated region
        $region17: #{tpu_custom_call.1} parent=11 // pred_check
          %p233 = pneg %p173
        $region18: #{tpu_custom_call.1} parent=11 // pred_check_branch
          %235 = sbr.rel (%p233) target = $region20
        $region19: #{tpu_custom_call.1} parent=11 // pred_region
          %p236 = scmp.lt.s32.totalorder %s29, 0
          %s237 = scalar_select %p236, %s29, 0
          %s238 = scalar_lea.vmem %s4, %s237
        $region20: #{tpu_custom_call.1} parent=11 // pred_fallthru
          _
      $region12: #{tpu_custom_call.1} parent=5 // pred_fallthru
        _
      %p239 = scmp.lt.s32.totalorder %s18, 2
      // Predicated region
      $region21: #{tpu_custom_call.1} parent=5 // pred_check
        %p240 = pneg %p239
      $region22: #{tpu_custom_call.1} parent=5 // pred_check_branch
        %242 = sbr.rel (%p240) target = $region24
      $region23: #{tpu_custom_call.1} parent=5 // pred_region
        // Predicated region
        $region25: #{tpu_custom_call.1} parent=23 // pred_check
          %p243 = pneg %p59
        $region26: #{tpu_custom_call.1} parent=23 // pred_check_branch
          %245 = sbr.rel (%p243) target = $region28
        $region27: #{tpu_custom_call.1} parent=23 // pred_region
          %s246 = sand.u32 %s49, 1
          %s247 = scalar_lea.sflag [#allocation3], %s246
          %s248 = sand.u32 %s49, 1
          %s249 = smul.addr %s248, 8
          %s250 = scalar_lea.vmem [#allocation2], %s249
          %s252 = ssub.s32 128, 128
          %253 = vsyncadd %s247, %s252
          %s254 = sadd.s32 %s27, %s25
          %s255 = smul.addr %s254, 128
          %s256 = scalar_lea.hbm %s0, %s255
          %s258 = sshll.u32 %s250, 4
          %s259 = int_to_ptr.vmem [resolvable:$true] %s258
          %261 = dma.hbm_to_vmem [thread:$0]  %s256, 128, %s259, %s247
        $region28: #{tpu_custom_call.1} parent=23 // pred_fallthru
          _
        // Predicated region
        $region29: #{tpu_custom_call.1} parent=23 // pred_check
          %p262 = pneg %p87
        $region30: #{tpu_custom_call.1} parent=23 // pred_check_branch
          %264 = sbr.rel (%p262) target = $region32
        $region31: #{tpu_custom_call.1} parent=23 // pred_region
          %p265 = scmp.lt.s32.totalorder %s25, 1
          %s266 = scalar_select %p265, %s25, 1
          %p267 = scmp.lt.s32.totalorder %s26, 0
          %s268 = scalar_select %p267, %s26, 0
          %s269 = sadd.s32 %s268, %s266
          %s270 = scalar_lea.vmem %s1, %s269
        $region32: #{tpu_custom_call.1} parent=23 // pred_fallthru
          _
        // Predicated region
        $region33: #{tpu_custom_call.1} parent=23 // pred_check
          %p271 = pneg %p115
        $region34: #{tpu_custom_call.1} parent=23 // pred_check_branch
          %273 = sbr.rel (%p271) target = $region36
        $region35: #{tpu_custom_call.1} parent=23 // pred_region
          %p274 = scmp.lt.s32.totalorder %s25, 1
          %s275 = scalar_select %p274, %s25, 1
          %p276 = scmp.lt.s32.totalorder %s26, 0
          %s277 = scalar_select %p276, %s26, 0
          %s278 = sadd.s32 %s277, %s275
          %s279 = scalar_lea.vmem %s2, %s278
        $region36: #{tpu_custom_call.1} parent=23 // pred_fallthru
          _
      $region24: #{tpu_custom_call.1} parent=5 // pred_fallthru
        _
      %p280 = scmp.le.s32.totalorder 1, %s18
      %p281 = scmp.lt.s32.totalorder %s18, 3
      %p282 = pnand %p280, %p281
      %p283 = pneg %p282
      // Predicated region
      $region37: #{tpu_custom_call.1} parent=5 // pred_check
        _
      $region38: #{tpu_custom_call.1} parent=5 // pred_check_branch
        %285 = sbr.rel (%p282) target = $region40
      $region39: #{tpu_custom_call.1} parent=5 // pred_region
        %s286 = ssub.s32 %s18, 1
        %s287 = sand.u32 %s52, 1
        %s288 = scalar_lea.sflag [#allocation3], %s287
        %s289 = sand.u32 %s52, 1
        %s290 = smul.addr %s289, 8
        %s291 = scalar_lea.vmem [#allocation2], %s290
        // Predicated region
        $region41: #{tpu_custom_call.1} parent=39 // pred_check
          %p292 = pneg %p65
        $region42: #{tpu_custom_call.1} parent=39 // pred_check_branch
          %294 = sbr.rel (%p292) target = $region44
        $region43: #{tpu_custom_call.1} parent=39 // pred_region
          %295 = dma.done %s288, 128
        $region44: #{tpu_custom_call.1} parent=39 // pred_fallthru
          _
        // Predicated region
        $region45: #{tpu_custom_call.1} parent=39 // pred_check
          %p296 = pneg %p147
        $region46: #{tpu_custom_call.1} parent=39 // pred_check_branch
          %298 = sbr.rel (%p296) target = $region48
        $region47: #{tpu_custom_call.1} parent=39 // pred_region
          %299 = dma.done [#allocation6], 512
        $region48: #{tpu_custom_call.1} parent=39 // pred_fallthru
          _
        %s300 = sand.u32 %s52, 1
        %s301 = scalar_lea.sflag [#allocation3], %s300
        %s302 = sand.u32 %s52, 1
        %s303 = smul.addr %s302, 8
        %s304 = scalar_lea.vmem [#allocation2], %s303
        %p305 = pneg %p65
        %p306 = pneg %p62
        %p307 = scmp.lt.s32.totalorder %s28, 1
        %s308 = scalar_select %p307, %s28, 1
        %p309 = scmp.lt.s32.totalorder %s29, 0
        %s310 = scalar_select %p309, %s29, 0
        %s311 = sadd.s32 %s310, %s308
        %s312 = scalar_lea.vmem %s1, %s311
        %p313 = pneg %p93
        %p314 = pneg %p90
        %p315 = scmp.lt.s32.totalorder %s28, 1
        %s316 = scalar_select %p315, %s28, 1
        %p317 = scmp.lt.s32.totalorder %s29, 0
        %s318 = scalar_select %p317, %s29, 0
        %s319 = sadd.s32 %s318, %s316
        %s320 = scalar_lea.vmem %s2, %s319
        %p321 = pneg %p121
        %p322 = pneg %p118
        %p323 = pneg %p147
        %p324 = pneg %p144
        %p325 = scmp.lt.s32.totalorder %s29, 0
        %s326 = scalar_select %p325, %s29, 0
        %s327 = scalar_lea.vmem %s4, %s326
        %p328 = pneg %p173
        %p329 = pneg %p170
        %p330 = pneg %p203
        %p331 = pneg %p200
        %s332 = sand.u32 %s190, 1
        %s333 = scalar_lea.sflag [#allocation4], %s332
        %s334 = sand.u32 %s190, 1
        %s335 = smul.addr %s334, 8
        %s336 = scalar_lea.vmem [#allocation7], %s335
        %p337 = scmp.lt.s32.totalorder %s28, 1
        %s338 = scalar_select %p337, %s28, 1
        %p339 = scmp.lt.s32.totalorder %s29, 0
        %s340 = scalar_select %p339, %s29, 0
        %s341 = sadd.s32 %s340, %s338
        %s342 = scalar_lea.vmem %s1, %s341
        %p343 = scmp.lt.s32.totalorder %s28, 1
        %s344 = scalar_select %p343, %s28, 1
        %p345 = scmp.lt.s32.totalorder %s29, 0
        %s346 = scalar_select %p345, %s29, 0
        %s347 = sadd.s32 %s346, %s344
        %s348 = scalar_lea.vmem %s2, %s347
        %p349 = scmp.lt.s32.totalorder %s29, 0
        %s350 = scalar_select %p349, %s29, 0
        %s351 = scalar_lea.vmem %s4, %s350
        %v352 = vld [vmem:[%s291] sm:$0xff]
        %v353 = vld [vmem:[#allocation5] sm:$0xff]
        %v354 = vld [vmem:[#allocation5 + $0x8] sm:$0xff]
        %v355 = vld [vmem:[#allocation5 + $0x10] sm:$0xff]
        %v356 = vld [vmem:[#allocation5 + $0x18] sm:$0xff]
        %v357 = vld [vmem:[%s351] sm:$0x1]
        %v359 = vlaneseq
        %v360 = vshrl.u32 %v359, 7
        %v361 = vsub.s32 0, %v360
        %v362 = vrot.slane %v357, %v361
        %vm364 = vcmask 261120
        %v366 = vsel %vm364, %v352, 0
        %368 = vmatprep.subr.mxu0 0.0
        %369 = vmatpush1.msra.mxu0 %v353
        %370 = vmatprep.subr.mxu0 0.0
        %371 = vmatpush1.msra.mxu0 %v354
        %372 = vmatprep.subr.mxu0 0.0
        %373 = vmatpush1.msra.mxu0 %v355
        %374 = vmatprep.subr.mxu0 0.0
        %375 = vmatpush1.msra.mxu0 %v356
        %376 = vmatprep.subr.mxu0 0.0
        %377 = vmatpush1.msra.mxu0 0.0
        %378 = vmatprep.subr.mxu0 0.0
        %379 = vmatpush1.msra.mxu0 0.0
        %380 = vmatprep.subr.mxu0 0.0
        %381 = vmatpush1.msra.mxu0 0.0
        %382 = vmatprep.subr.mxu0 0.0
        %383 = vmatpush1.msra.mxu0 0.0
        %384 = vmatprep.subr.mxu0 0.0
        %385 = vmatpush1.msra.mxu0 0.0
        %386 = vmatprep.subr.mxu0 0.0
        %387 = vmatpush1.msra.mxu0 0.0
        %388 = vmatprep.subr.mxu0 0.0
        %389 = vmatpush1.msra.mxu0 0.0
        %390 = vmatprep.subr.mxu0 0.0
        %391 = vmatpush1.msra.mxu0 0.0
        %392 = vmatprep.subr.mxu0 0.0
        %393 = vmatpush1.msra.mxu0 0.0
        %394 = vmatprep.subr.mxu0 0.0
        %395 = vmatpush1.msra.mxu0 0.0
        %396 = vmatprep.subr.mxu0 0.0
        %397 = vmatpush1.msra.mxu0 0.0
        %398 = vmatprep.subr.mxu0 0.0
        %399 = vmatpush1.msra.mxu0 0.0
        %400 = vmatprep.subr.mxu0 0.0
        %401 = vmatpush1.msra.mxu0 0.0
        %402 = vmatprep.subr.mxu0 0.0
        %403 = vmatpush1.msra.mxu0 0.0
        %404 = vmatprep.subr.mxu0 0.0
        %405 = vmatpush1.msra.mxu0 0.0
        %406 = vmatprep.subr.mxu0 0.0
        %407 = vmatpush1.msra.mxu0 0.0
        %408 = vmatprep.subr.mxu0 0.0
        %409 = vmatpush1.msra.mxu0 0.0
        %410 = vmatprep.subr.mxu0 0.0
        %411 = vmatpush1.msra.mxu0 0.0
        %412 = vmatprep.subr.mxu0 0.0
        %413 = vmatpush1.msra.mxu0 0.0
        %414 = vmatprep.subr.mxu0 0.0
        %415 = vmatpush1.msra.mxu0 0.0
        %416 = vmatprep.subr.mxu0 0.0
        %417 = vmatpush1.msra.mxu0 0.0
        %418 = vmatprep.subr.mxu0 0.0
        %419 = vmatpush1.msra.mxu0 0.0
        %420 = vmatprep.subr.mxu0 0.0
        %421 = vmatpush1.msra.mxu0 0.0
        %422 = vmatprep.subr.mxu0 0.0
        %423 = vmatpush1.msra.mxu0 0.0
        %424 = vmatprep.subr.mxu0 0.0
        %425 = vmatpush1.msra.mxu0 0.0
        %426 = vmatprep.subr.mxu0 0.0
        %427 = vmatpush1.msra.mxu0 0.0
        %428 = vmatprep.subr.mxu0 0.0
        %429 = vmatpush1.msra.mxu0 0.0
        %430 = vmatprep.subr.mxu0 0.0
        %431 = vmatpush1.msra.mxu0 0.0
        %432 = vmatprep.mubr.f32.mxu0 0.0
        %433 = vmatmul.mubr.f32.gmra.mrb[0].mxu0 %v366
        %v434 = vpop.f32.mrb[0].mxu0
        %v435 = vadd.f32 %v362, %v434
        %v436 = vpop.f32.mrb[0].mxu0
        %437 = vdwg.mxu0
        %v438 = vand.u32 2147483647, %v435
        %vm439 = vcmp.le.f32.partialorder %v438, 0.7853982
        %vm440 = vcmp.lt.s32.totalorder %v435, 0
        %v441 = vand.u32 %v435, 2139095040
        %v442 = vshrl.u32 %v441, 23
        %v443 = vsub.s32 %v442, 127
        %v444 = vand.u32 2147483647, %v435
        %v445 = vand.u32 %v444, 8388607
        %v446 = vor.u32 %v445, 8388608
        %v447 = vsub.s32 0, %v446
        %v448 = vadd.s32 %v443, 1
        %vm449 = vcmp.gt.s32.totalorder %v448, 0
        %v450 = vsel %vm449, %v448, 0
        %v451 = vshrl.u32 %v450, 5
        %v452 = vand.u32 %v450, 31
        %v453 = vsub.s32 32, %v452
        %v454 = vshrl.u32 683565275, %v453
        %v455 = vshll.u32 683565275, %v452
        %v456 = vshrl.u32 2475754826, %v453
        %v457 = vor.u32 %v455, %v456
        %v458 = vshll.u32 2475754826, %v452
        %v459 = vshrl.u32 2131351028, %v453
        %v460 = vor.u32 %v458, %v459
        %v461 = vshll.u32 2131351028, %v452
        %v462 = vshrl.u32 2102212464, %v453
        %v463 = vor.u32 %v461, %v462
        %v464 = vshll.u32 2102212464, %v452
        %v465 = vshrl.u32 920167782, %v453
        %v466 = vor.u32 %v464, %v465
        %v467 = vshll.u32 920167782, %v452
        %v468 = vshrl.u32 1326507024, %v453
        %v469 = vor.u32 %v467, %v468
        %vm470 = vcmp.lt.s32.totalorder %v451, 1
        %vm471 = vcmp.lt.s32.totalorder %v451, 2
        %vm472 = vcmp.lt.s32.totalorder %v451, 3
        %vm473 = vcmp.lt.s32.totalorder %v451, 4
        %v474 = vsel %vm470, %v454, %v457
        %v475 = vsel %vm473, %v463, 2102212464
        %v476 = vsel %vm472, %v460, %v475
        %v477 = vsel %vm471, %v474, %v476
        %v478 = vsel %vm470, %v457, %v460
        %v479 = vsel %vm473, %v466, 920167782
        %v480 = vsel %vm472, %v463, %v479
        %v481 = vsel %vm471, %v478, %v480
        %v482 = vsel %vm470, %v460, %v463
        %v483 = vsel %vm473, %v469, 1326507024
        %v484 = vsel %vm472, %v466, %v483
        %v485 = vsel %vm471, %v482, %v484
        %v486 = vshll.u32 %v446, 8
        %v487 = vmul.u32.u64.compose %v486, %v485
        %v488 = vextract.low.u32 %v487
        %v489 = vextract.high.u32 %v487
        %v490 = vmul.u32.u64.compose %v486, %v481
        %v491 = vextract.low.u32 %v490
        %v492 = vextract.high.u32 %v490
        %v493 = vmul.u32 %v486, %v477
        %v494 = vadd.s32 %v489, %v491
        %vm495 = vc.u32 %v489, %v491
        %v496 = vadd.s32 %v492, 1
        %v497 = vsel %vm495, %v496, %v492
        %v498 = vadd.s32 %v493, %v497
        %v499 = vadd.s32 %v498, 536870912
        %v500 = vshrl.u32 %v499, 30
        %v501 = vshll.u32 %v500, 30
        %v502 = vsub.s32 %v498, %v501
        %vm503 = vcmp.lt.s32.totalorder %v502, 0
        %v504 = vsub.s32 0, %v502
        %v505 = vsel %vm503, %v504, %v502
        %v506 = vclz %v505
        %v507 = vsub.s32 %v506, 2
        %vm508 = vcmp.gt.s32.totalorder 0, %v507
        %v509 = vsel %vm508, 0, %v507
        %v510 = vsub.s32 32, %v509
        %v511 = vshll.u32 %v502, %v509
        %v512 = vshrl.u32 %v494, %v510
        %v513 = vor.u32 %v511, %v512
        %v514 = vsub.s32 4294967266, %v509
        %v515 = vadd.s32 %v514, 127
        %v516 = vshll.u32 %v515, 23
        %v517 = vor.u32 4788187, %v516
        %v518 = vand.u32 2147483647, %v517
        %v520 = vcvt.s32.f32 %v513
        %v521 = vmul.f32 %v520, %v518
        %v522 = vxor.u32 %v521, 2147483648
        %v523 = vsel %vm440, %v522, %v521
        %v524 = vsub.s32 4, %v500
        %v525 = vsel %vm440, %v524, %v500
        %v526 = vsel %vm439, %v435, %v523
        %v527 = vsel %vm439, 0, %v525
        %v528 = vcosq.f32.pop %v526
        %v529 = vsinq.f32.pop %v526
        %vm530 = vweird.f32 %v435
        %v531 = vadd.s32 %v527, 3
        %v532 = vand.u32 %v531, 3
        %vm533 = vcmp.lt.s32.totalorder %v532, 2
        %vm534 = vcmp.eq.s32.totalorder %v532, 0
        %v535 = vxor.u32 %v529, 2147483648
        %v536 = vsel %vm534, %v528, %v535
        %vm537 = vcmp.eq.s32.totalorder %v532, 2
        %v538 = vxor.u32 %v528, 2147483648
        %v539 = vsel %vm537, %v538, %v529
        %v540 = vsel %vm533, %v536, %v539
        %v541 = vsel %vm530, nan, %v540
        %v542 = vld [vmem:[%s342] sm:$0x1]
        %v544 = vlaneseq
        %v545 = vshrl.u32 %v544, 7
        %v546 = vsub.s32 0, %v545
        %v547 = vrot.slane %v542, %v546
        %v549 = vmul.f32 %v547, %v541
        %v550 = vld [vmem:[%s348] sm:$0x1]
        %v552 = vlaneseq
        %v553 = vshrl.u32 %v552, 7
        %v554 = vsub.s32 0, %v553
        %v555 = vrot.slane %v550, %v554
        %v557 = vadd.f32 %v549, %v555
        %558 = vst [vmem:[%s336] sm:$0xff] %v557
        %s559 = sand.u32 %s190, 1
        %s560 = scalar_lea.sflag [#allocation4], %s559
        %s561 = sand.u32 %s190, 1
        %s562 = smul.addr %s561, 8
        %s563 = scalar_lea.vmem [#allocation7], %s562
        // Predicated region
        $region49: #{tpu_custom_call.1} parent=39 // pred_check
          %p564 = pneg %p200
        $region50: #{tpu_custom_call.1} parent=39 // pred_check_branch
          %566 = sbr.rel (%p564) target = $region52
        $region51: #{tpu_custom_call.1} parent=39 // pred_region
          %s568 = ssub.s32 128, 128
          %569 = vsyncadd %s560, %s568
          %s570 = sadd.s32 %s29, %s30
          %s571 = sadd.s32 %s570, %s28
          %s572 = smul.addr %s571, 128
          %s573 = scalar_lea.hbm %s5, %s572
          %s575 = sshll.u32 %s563, 4
          %s576 = int_to_ptr.vmem [resolvable:$true] %s575
          %578 = dma.vmem_to_hbm [thread:$0]  %s576, 128, %s573, %s560
        $region52: #{tpu_custom_call.1} parent=39 // pred_fallthru
          _
      $region40: #{tpu_custom_call.1} parent=5 // pred_fallthru
        _
      %p579 = scmp.le.s32.totalorder 2, %s18
      // Predicated region
      $region53: #{tpu_custom_call.1} parent=5 // pred_check
        %p580 = pneg %p579
      $region54: #{tpu_custom_call.1} parent=5 // pred_check_branch
        %582 = sbr.rel (%p580) target = $region56
      $region55: #{tpu_custom_call.1} parent=5 // pred_region
        %s583 = ssub.s32 %s18, 2
        // Predicated region
        $region57: #{tpu_custom_call.1} parent=55 // pred_check
          %p584 = pneg %p206
        $region58: #{tpu_custom_call.1} parent=55 // pred_check_branch
          %586 = sbr.rel (%p584) target = $region60
        $region59: #{tpu_custom_call.1} parent=55 // pred_region
          %s587 = sand.u32 %s191, 1
          %s588 = scalar_lea.sflag [#allocation4], %s587
          %s589 = sand.u32 %s191, 1
          %s590 = smul.addr %s589, 8
          %s591 = scalar_lea.vmem [#allocation7], %s590
          %592 = dma.done %s588, 128
        $region60: #{tpu_custom_call.1} parent=55 // pred_fallthru
          _
      $region56: #{tpu_custom_call.1} parent=5 // pred_fallthru
        _
    $region6: #{tpu_custom_call.1} parent=1 // loop_footer
      %s22 = sadd.s32 1, %s18
    $region7: #{tpu_custom_call.1} parent=1 // loop_footer_branch
      %17 = sbr.rel target = $region3
    $region8: #{tpu_custom_call.1} parent=1 // loop_exit
      _
    %593 = vsyncpa [#allocation3], 1
    %s594 = scalar_lea.sflag [#allocation3], 1
    %595 = vsyncpa %s594, 1
    %596 = vsyncpa [#allocation6], 1
    %597 = vsyncpa [#allocation4], 1
    %s598 = scalar_lea.sflag [#allocation4], 1
    %599 = vsyncpa %s598, 1

</llo_original>
